<compile_context>
chip_gen: v5e
topology: v5e:2x2
jax: 0.10.0
libtpu: 0.0.40
codegen_flags: <defaults>
</compile_context>

<pallas_src>
import math
import functools

import jax
import jax.numpy as jnp
from jax.experimental import pallas as pl
from jax.experimental.pallas import tpu as pltpu


def _threshold_kernel(x_ref, o_ref, *, scale):
    # Mem-bound elementwise hot path: tanh on the EUP, scalar multiply on the
    # VPU -- both units have slack, so compute is fully hidden behind the DMA.
    # Compute in f32 so sub-32-bit inputs don't round the scale, then cast
    # back to the output dtype.
    x = x_ref[...]
    y = jnp.tanh(x.astype(jnp.float32)) * jnp.float32(scale)
    o_ref[...] = y.astype(o_ref.dtype)


def threshold(value: jnp.ndarray) -> jnp.ndarray:
    """Pallas equivalent of Threshold.forward: tanh(value) * log(value.shape[-1])."""
    orig_shape = value.shape
    orig_dtype = value.dtype

    # Scale comes from the ORIGINAL last dim (before any reshape) and is a
    # plain Python float baked into the kernel as a literal.
    scale = float(math.log(orig_shape[-1]))

    total = 1
    for d in orig_shape:
        total *= d

    # Widest lane extent (multiple of 128) that divides the element count ->
    # no padding copy for typical NN shapes.  Fall back to 128 lanes + pad.
    lanes = None
    for cand in (1024, 512, 256, 128):
        if total >= cand and total % cand == 0:
            lanes = cand
            break
    if lanes is None:
        lanes = 128

    rows = -(-total // lanes)
    padded_total = rows * lanes

    flat = value.reshape(-1)
    if padded_total != total:
        flat = jnp.pad(flat, (0, padded_total - total))
    x2d = flat.reshape(rows, lanes)

    # Row tiling: target ~2 MiB per block (rounded down to a multiple of 8
    # sublanes).  Small inputs take the whole row extent as a single block
    # (block dim == full dim is always layout-legal).
    itemsize = jnp.dtype(orig_dtype).itemsize
    target_rows = max(8, ((2 * 1024 * 1024) // (lanes * itemsize)) // 8 * 8)
    if rows <= target_rows:
        tile_rows = rows
        grid_rows = 1
    else:
        tile_rows = target_rows
        grid_rows = -(-rows // tile_rows)  # Pallas handles a partial last block

    out2d = pl.pallas_call(
        functools.partial(_threshold_kernel, scale=scale),
        out_shape=jax.ShapeDtypeStruct((rows, lanes), orig_dtype),
        grid_spec=pltpu.PrefetchScalarGridSpec(
            num_scalar_prefetch=0,
            grid=(grid_rows,),
            in_specs=[pl.BlockSpec((tile_rows, lanes), lambda i: (i, 0))],
            out_specs=pl.BlockSpec((tile_rows, lanes), lambda i: (i, 0)),
        ),
        # "parallel" lets v7x shard grid steps across its 2 TensorCores;
        # measured ~neutral on v5e/v6e so it costs nothing there.
        compiler_params=pltpu.CompilerParams(
            dimension_semantics=("parallel",)
        ),
    )(x2d)

    out = out2d.reshape(-1)
    if padded_total != total:
        out = out[:total]
    return out.reshape(orig_shape)


if __name__ == "__main__":
    key = jax.random.PRNGKey(0)
    # NCHW, matching the PyTorch module's typical conv-activation input.
    x = jax.random.normal(key, (2, 4, 16, 16), dtype=jnp.float32)

    out = threshold(x)
    jax.block_until_ready(out)

    # Reference check against plain JAX.
    ref = jnp.tanh(x) * math.log(x.shape[-1])
    assert out.shape == x.shape
    assert out.dtype == x.dtype
    assert jnp.allclose(out, ref, atol=1e-5, rtol=1e-5)

    print("KERNEL_OK")
</pallas_src>

<mosaic_0001>
module attributes {stable_mosaic.version = 11 : i64} {
  func.func @_threshold_kernel(%arg0: i32, %arg1: memref<2x1024xf32, #tpu.memory_space<vmem>>, %arg2: memref<2x1024xf32, #tpu.memory_space<vmem>>) attributes {dimension_semantics = [#tpu.dimension_semantics<parallel>], iteration_bounds = array<i64: 1>, scalar_prefetch = 0 : i64, scratch_operands = 0 : i64, tpu.core_type = #tpu.core_type<tc>, window_params = [{transform_indices = @transform_0, window_bounds = array<i64: 2, 1024>}, {transform_indices = @transform_1, window_bounds = array<i64: 2, 1024>}]} {
    %c0 = arith.constant 0 : index
    %c0_0 = arith.constant 0 : index
    %0 = vector.load %arg1[%c0, %c0_0] : memref<2x1024xf32, #tpu.memory_space<vmem>>, vector<2x1024xf32>
    %1 = math.tanh %0 : vector<2x1024xf32>
    %cst = arith.constant 2.77258873 : f32
    %2 = vector.broadcast %cst : f32 to vector<2x1024xf32>
    %3 = arith.mulf %1, %2 : vector<2x1024xf32>
    %c0_1 = arith.constant 0 : index
    %c0_2 = arith.constant 0 : index
    %4 = vector.load %arg2[%c0_1, %c0_2] : memref<2x1024xf32, #tpu.memory_space<vmem>>, vector<2x1024xf32>
    tpu.vector_store %arg2[%c0_1, %c0_2], %3 {strides = array<i32>} : memref<2x1024xf32, #tpu.memory_space<vmem>>, vector<2x1024xf32>,
    return
  }
  func.func @transform_0(%arg0: i32) -> (i32, i32) {
    %c0_i32 = arith.constant 0 : i32
    %c0_i32_0 = arith.constant 0 : i32
    return %arg0, %c0_i32 : i32, i32
  }
  func.func @transform_1(%arg0: i32) -> (i32, i32) {
    %c0_i32 = arith.constant 0 : i32
    %c0_i32_0 = arith.constant 0 : i32
    return %arg0, %c0_i32 : i32, i32
  }
}

</mosaic_0001>

<llo_original>
// kernel: tpu_custom_call.1
$region0: #{tpu_custom_call.1}
  #allocation0 [shape = 'u32[]', space=smem, size = 0x4, offset = 0x4, fixed_abs, tag = 'smem constant byte address 0x4 - core index']
  #allocation1 [shape = 'u32[72,128]{1,0:T(1,128)}', space=vmem, size = 0x9000, scoped, tag = 'internal scratch']
  %s0 = inlined_call_operand.hbm [shape: f32[2,1024], index: 0, kind: input, shape index: {}]
  %s1 = inlined_call_operand.hbm [shape: f32[2,1024], index: 1, kind: output, shape index: {}]
  %s2 = sld [smem:[#allocation0]]
  $region18: #{tpu_custom_call.1} parent=0
    _
  %s4 = ssub.s32 1, %s2
  %s5 = scalar_select 0, %s4, %s2
  $region1: #{tpu_custom_call.1} parent=0
    #allocation2 [shape = 'u8[8192]{0}', space=vmem, size = 0x2000, scoped, tag = 'input window, operand 0, single buffered']
    #allocation3 [shape = 's32[1]{0}', space=sflag, size = 0x4, scoped, tag = 'scoped memory for tpu_custom_call.1']
    #allocation4 [shape = 's32[1]{0}', space=sflag, size = 0x4, scoped, tag = 'scoped memory for tpu_custom_call.1']
    #allocation5 [shape = 'u8[8192]{0}', space=vmem, size = 0x2000, scoped, tag = 'output window, operand 0, single buffered']
    %6 = vsyncpa [#allocation3], 0
    %7 = vsyncpa [#allocation4], 0
    // Predicated region
    $region2: #{tpu_custom_call.1} parent=1 // pred_check
      _
    $region3: #{tpu_custom_call.1} parent=1 // pred_check_branch
      %9 = sbr.rel (0) target = $region5
    $region4: #{tpu_custom_call.1} parent=1 // pred_region
      %11 = vsyncadd [#allocation3], 0
      %s13 = sshll.u32 %s0, 4
      %s14 = int_to_ptr.hbm [resolvable:$true] %s13
      %s15 = sshll.u32 [#allocation2], 4
      %s16 = int_to_ptr.vmem [resolvable:$true] %s15
      %18 = dma.hbm_to_vmem [thread:$0]  %s14, 256, %s16, [#allocation3]
    $region5: #{tpu_custom_call.1} parent=1 // pred_fallthru
      _
    // Predicated region
    $region6: #{tpu_custom_call.1} parent=1 // pred_check
      _
    $region7: #{tpu_custom_call.1} parent=1 // pred_check_branch
      %20 = sbr.rel (0) target = $region9
    $region8: #{tpu_custom_call.1} parent=1 // pred_region
      %22 = dma.done [#allocation3], 256
    $region9: #{tpu_custom_call.1} parent=1 // pred_fallthru
      _
    %v23 = vld [vmem:[#allocation2] sm:$0xff]
    %v24 = vld [vmem:[#allocation2 + $0x8] sm:$0xff]
    %v25 = vtanh.pop %v23
    %v26 = vtanh.pop %v24
    %v27 = vmul.f32 %v25, 2.7725887
    %v28 = vmul.f32 %v26, 2.7725887
    %29 = vst [vmem:[#allocation5] sm:$0xff] %v27
    %30 = vst [vmem:[#allocation5 + $0x8] sm:$0xff] %v28
    // Predicated region
    $region10: #{tpu_custom_call.1} parent=1 // pred_check
      _
    $region11: #{tpu_custom_call.1} parent=1 // pred_check_branch
      %32 = sbr.rel (0) target = $region13
    $region12: #{tpu_custom_call.1} parent=1 // pred_region
      %34 = vsyncadd [#allocation4], 0
      %s36 = sshll.u32 [#allocation5], 4
      %s37 = int_to_ptr.vmem [resolvable:$true] %s36
      %s38 = sshll.u32 %s1, 4
      %s39 = int_to_ptr.hbm [resolvable:$true] %s38
      %41 = dma.vmem_to_hbm [thread:$0]  %s37, 256, %s39, [#allocation4]
    $region13: #{tpu_custom_call.1} parent=1 // pred_fallthru
      _
    // Predicated region
    $region14: #{tpu_custom_call.1} parent=1 // pred_check
      _
    $region15: #{tpu_custom_call.1} parent=1 // pred_check_branch
      %43 = sbr.rel (0) target = $region17
    $region16: #{tpu_custom_call.1} parent=1 // pred_region
      %45 = dma.done [#allocation4], 256
    $region17: #{tpu_custom_call.1} parent=1 // pred_fallthru
      _
    %46 = vsyncpa [#allocation3], 1
    %47 = vsyncpa [#allocation4], 1

</llo_original>
